<compile_context>
chip_gen: v7x
topology: tpu7x:2x2x1
jax: 0.10.0
libtpu: 0.0.40
codegen_flags: <defaults>
</compile_context>

<pallas_src>
import functools

import jax
import jax.numpy as jnp
import numpy as np
from jax.experimental import pallas as pl
from jax.experimental.pallas import tpu as pltpu


def _scatter_kernel(idx_ref, xt_ref, o_ref, *, t_hw, bt):
    # idx_ref: (bt, M, 1) int32 ; xt_ref: (bt, N, M) ; o_ref: (bt, N, t_hw)
    M = xt_ref.shape[2]
    start = pl.program_id(1) * t_hw  # global hw offset of this spatial tile

    # bt is a small compile-time constant -> static unrolled loop.
    for bb in range(bt):
        idx = idx_ref[bb]                                                # (M, 1)
        cols = jax.lax.broadcasted_iota(jnp.int32, (M, t_hw), 1) + start  # (M, t_hw)
        # One-hot routing matrix for this tile, in x's dtype (bf16 x -> bf16 MXU path).
        onehot = (cols == idx).astype(xt_ref.dtype)                       # (M, t_hw)
        out = jnp.dot(xt_ref[bb], onehot,
                      preferred_element_type=jnp.float32)                 # (N, t_hw) f32
        o_ref[bb] = out.astype(o_ref.dtype)


def _ws_bytes(bt, t, M, N, itemsize):
    """Conservative per-step VMEM working-set estimate (bytes)."""
    inter = 3 * M * t * 4 + N * t * 4                 # iota / hit / one-hot + f32 matmul result
    out_blk = 2 * bt * N * t * itemsize               # double-buffered output block
    in_blk = 2 * bt * (N * M * itemsize + M * 4)      # resident x block + indices
    return inter + out_blk + in_blk


def _choose_blocks(B, M, N, HW, itemsize):
    """Pick (bt, t_hw): batch block and spatial tile (multiple of 128, <= 2048)."""
    BUDGET = 12 << 20  # ~12 MiB: fits v5e's 16 MiB scoped default and v7x's 64 MiB physical
    if HW <= 128 or _ws_bytes(1, HW, M, N, itemsize) <= BUDGET:
        t_hw = HW  # single tile covering the full spatial dim
    else:
        t_hw = 128
        while t_hw * 2 <= min(2048, HW) and _ws_bytes(1, t_hw * 2, M, N, itemsize) <= BUDGET:
            t_hw *= 2
    bt = 1
    for cand in range(min(B, 8), 1, -1):  # amortize per-step overhead for small problems
        if B % cand == 0 and _ws_bytes(cand, t_hw, M, N, itemsize) <= BUDGET:
            bt = cand
            break
    return bt, t_hw


def scatter_connection(x, spatial_size, location, scatter_type="add"):
    """Pallas equivalent of ScatterConnection(scatter_type).forward(x, spatial_size, location)."""
    assert scatter_type in ("cover", "add")
    B, M, N = x.shape
    H, W = spatial_size
    HW = H * W
    itemsize = jnp.dtype(x.dtype).itemsize

    # Flat spatial index hw = y*W + x (same index math as the torch module).
    index = (location[:, :, 1] + location[:, :, 0] * W).astype(jnp.int32)  # (B, M)

    if scatter_type == "cover":
        # Last-write-wins: drop every entity that has a later duplicate at the same location.
        # O(M^2) on the indices here replaces the (M, HW) winner reduction inside the kernel.
        m_ids = jnp.arange(M, dtype=jnp.int32)
        later_dup = (index[:, :, None] == index[:, None, :]) & \
                    (m_ids[None, :, None] < m_ids[None, None, :])          # (B, M, M)
        index = jnp.where(jnp.any(later_dup, axis=2), -1, index)           # losers never hit

    index = index[:, :, None]                                              # (B, M, 1)
    # Wrapper-side transpose of x (small vs. the output); keeps the in-kernel matmul a plain
    # (N, M) @ (M, T_HW) MXU contraction.
    x_t = jnp.swapaxes(x, 1, 2)                                            # (B, N, M)

    bt, t_hw = _choose_blocks(B, M, N, HW, itemsize)
    n_hw = pl.cdiv(HW, t_hw)

    kernel = functools.partial(_scatter_kernel, t_hw=t_hw, bt=bt)

    out = pl.pallas_call(
        kernel,
        out_shape=jax.ShapeDtypeStruct((B, N, HW), x.dtype),
        grid_spec=pltpu.PrefetchScalarGridSpec(
            num_scalar_prefetch=0,
            grid=(B // bt, n_hw),  # HW tiles innermost: x/idx blocks stay resident in VMEM
            in_specs=[
                pl.BlockSpec((bt, M, 1), lambda b, h: (b, 0, 0)),
                pl.BlockSpec((bt, N, M), lambda b, h: (b, 0, 0)),
            ],
            out_specs=pl.BlockSpec((bt, N, t_hw), lambda b, h: (b, 0, h)),
        ),
        compiler_params=pltpu.CompilerParams(
            dimension_semantics=("parallel", "parallel"),
            vmem_limit_bytes=32 * 1024 * 1024,
        ),
    )(index, x_t)

    return out.reshape(B, N, H, W)


def _reference_numpy(x, spatial_size, location, scatter_type):
    """Deterministic reference mirroring torch scatter_/scatter_add_ (in-order writes)."""
    x = np.asarray(x)
    location = np.asarray(location)
    B, M, N = x.shape
    H, W = spatial_size
    out = np.zeros((B, N, H * W), dtype=np.float32)
    for b in range(B):
        for m in range(M):
            hw = int(location[b, m, 0]) * W + int(location[b, m, 1])
            if scatter_type == "add":
                out[b, :, hw] += x[b, m, :]
            else:  # cover: later entity overwrites earlier one
                out[b, :, hw] = x[b, m, :]
    return out.reshape(B, N, H, W)


if __name__ == "__main__":
    B, M, N = 2, 8, 4
    H, W = 16, 16

    key = jax.random.PRNGKey(0)
    kx, ky, kxx = jax.random.split(key, 3)
    x = jax.random.normal(kx, (B, M, N), dtype=jnp.float32)
    loc_y = jax.random.randint(ky, (B, M, 1), 0, H, dtype=jnp.int32)
    loc_x = jax.random.randint(kxx, (B, M, 1), 0, W, dtype=jnp.int32)
    location = jnp.concatenate([loc_y, loc_x], axis=-1)  # (B, M, 2), (y, x)
    # Force at least one duplicate location per batch to exercise add/cover semantics.
    location = location.at[:, 1, :].set(location[:, 0, :])

    ok = True
    for scatter_type in ("add", "cover"):
        out = scatter_connection(x, (H, W), location, scatter_type=scatter_type)
        out = jax.block_until_ready(out)
        ref = _reference_numpy(x, (H, W), location, scatter_type)
        if out.shape != (B, N, H, W):
            ok = False
        if not np.allclose(np.asarray(out), ref, atol=1e-5, rtol=1e-5):
            ok = False

    if ok:
        print("KERNEL_OK")
</pallas_src>

<mosaic_0001>
module attributes {stable_mosaic.version = 11 : i64} {
  func.func @_scatter_kernel(%arg0: i32, %arg1: i32, %arg2: memref<2x8x1xi32, #tpu.memory_space<vmem>>, %arg3: memref<2x4x8xf32, #tpu.memory_space<vmem>>, %arg4: memref<2x4x256xf32, #tpu.memory_space<vmem>>) attributes {dimension_semantics = [#tpu.dimension_semantics<parallel>, #tpu.dimension_semantics<parallel>], iteration_bounds = array<i64: 1, 1>, scalar_prefetch = 0 : i64, scratch_operands = 0 : i64, tpu.core_type = #tpu.core_type<tc>, window_params = [{transform_indices = @transform_0, window_bounds = array<i64: 2, 8, 1>}, {transform_indices = @transform_1, window_bounds = array<i64: 2, 4, 8>}, {transform_indices = @transform_2, window_bounds = array<i64: 2, 4, 256>}]} {
    %c256_i32 = arith.constant 256 : i32
    %0 = arith.muli %arg1, %c256_i32 : i32
    %c0 = arith.constant 0 : index
    %c0_0 = arith.constant 0 : index
    %c0_1 = arith.constant 0 : index
    %1 = vector.load %arg2[%c0, %c0_0, %c0_1] : memref<2x8x1xi32, #tpu.memory_space<vmem>>, vector<1x8x1xi32>
    %2 = vector.shape_cast %1 : vector<1x8x1xi32> to vector<8x1xi32>
    %3 = tpu.iota {dimensions = array<i32: 1>} : vector<8x256xi32>
    %4 = vector.broadcast %0 : i32 to vector<8x256xi32>
    %5 = arith.addi %3, %4 : vector<8x256xi32>
    %6 = vector.broadcast %2 : vector<8x1xi32> to vector<8x256xi32>
    %7 = arith.cmpi eq, %5, %6 : vector<8x256xi32>
    %8 = arith.extui %7 : vector<8x256xi1> to vector<8x256xi32>
    %9 = arith.sitofp %8 : vector<8x256xi32> to vector<8x256xf32>
    %c0_2 = arith.constant 0 : index
    %c0_3 = arith.constant 0 : index
    %c0_4 = arith.constant 0 : index
    %10 = vector.load %arg3[%c0_2, %c0_3, %c0_4] : memref<2x4x8xf32, #tpu.memory_space<vmem>>, vector<1x4x8xf32>
    %11 = vector.shape_cast %10 : vector<1x4x8xf32> to vector<4x8xf32>
    %cst = arith.constant dense<0.000000e+00> : vector<4x256xf32>
    %12 = tpu.matmul %11, %9, %cst {dimension_numbers = #tpu.dot_dimension_numbers<[1], [0], [0], [1], [0, 0, 1, 1], [], []>} : vector<4x8xf32>, vector<8x256xf32>, vector<4x256xf32> -> vector<4x256xf32>
    %c0_5 = arith.constant 0 : index
    %c0_6 = arith.constant 0 : index
    %c0_7 = arith.constant 0 : index
    %13 = vector.load %arg4[%c0_5, %c0_6, %c0_7] : memref<2x4x256xf32, #tpu.memory_space<vmem>>, vector<1x4x256xf32>
    %14 = vector.shape_cast %13 : vector<1x4x256xf32> to vector<4x256xf32>
    %15 = vector.shape_cast %12 : vector<4x256xf32> to vector<1x4x256xf32>
    tpu.vector_store %arg4[%c0_5, %c0_6, %c0_7], %15 {strides = array<i32>} : memref<2x4x256xf32, #tpu.memory_space<vmem>>, vector<1x4x256xf32>,
    %c1 = arith.constant 1 : index
    %c0_8 = arith.constant 0 : index
    %c0_9 = arith.constant 0 : index
    %16 = vector.load %arg2[%c1, %c0_8, %c0_9] : memref<2x8x1xi32, #tpu.memory_space<vmem>>, vector<1x8x1xi32>
    %17 = vector.shape_cast %16 : vector<1x8x1xi32> to vector<8x1xi32>
    %18 = tpu.iota {dimensions = array<i32: 1>} : vector<8x256xi32>
    %19 = vector.broadcast %0 : i32 to vector<8x256xi32>
    %20 = arith.addi %18, %19 : vector<8x256xi32>
    %21 = vector.broadcast %17 : vector<8x1xi32> to vector<8x256xi32>
    %22 = arith.cmpi eq, %20, %21 : vector<8x256xi32>
    %23 = arith.extui %22 : vector<8x256xi1> to vector<8x256xi32>
    %24 = arith.sitofp %23 : vector<8x256xi32> to vector<8x256xf32>
    %c1_10 = arith.constant 1 : index
    %c0_11 = arith.constant 0 : index
    %c0_12 = arith.constant 0 : index
    %25 = vector.load %arg3[%c1_10, %c0_11, %c0_12] : memref<2x4x8xf32, #tpu.memory_space<vmem>>, vector<1x4x8xf32>
    %26 = vector.shape_cast %25 : vector<1x4x8xf32> to vector<4x8xf32>
    %cst_13 = arith.constant dense<0.000000e+00> : vector<4x256xf32>
    %27 = tpu.matmul %26, %24, %cst_13 {dimension_numbers = #tpu.dot_dimension_numbers<[1], [0], [0], [1], [0, 0, 1, 1], [], []>} : vector<4x8xf32>, vector<8x256xf32>, vector<4x256xf32> -> vector<4x256xf32>
    %c1_14 = arith.constant 1 : index
    %c0_15 = arith.constant 0 : index
    %c0_16 = arith.constant 0 : index
    %28 = vector.load %arg4[%c1_14, %c0_15, %c0_16] : memref<2x4x256xf32, #tpu.memory_space<vmem>>, vector<1x4x256xf32>
    %29 = vector.shape_cast %28 : vector<1x4x256xf32> to vector<4x256xf32>
    %30 = vector.shape_cast %27 : vector<4x256xf32> to vector<1x4x256xf32>
    tpu.vector_store %arg4[%c1_14, %c0_15, %c0_16], %30 {strides = array<i32>} : memref<2x4x256xf32, #tpu.memory_space<vmem>>, vector<1x4x256xf32>,
    return
  }
  func.func @transform_0(%arg0: i32, %arg1: i32) -> (i32, i32, i32) {
    %c0_i32 = arith.constant 0 : i32
    %c0_i32_0 = arith.constant 0 : i32
    %c0_i32_1 = arith.constant 0 : i32
    return %arg0, %c0_i32, %c0_i32_0 : i32, i32, i32
  }
  func.func @transform_1(%arg0: i32, %arg1: i32) -> (i32, i32, i32) {
    %c0_i32 = arith.constant 0 : i32
    %c0_i32_0 = arith.constant 0 : i32
    %c0_i32_1 = arith.constant 0 : i32
    return %arg0, %c0_i32, %c0_i32_0 : i32, i32, i32
  }
  func.func @transform_2(%arg0: i32, %arg1: i32) -> (i32, i32, i32) {
    %c0_i32 = arith.constant 0 : i32
    %c0_i32_0 = arith.constant 0 : i32
    return %arg0, %c0_i32, %arg1 : i32, i32, i32
  }
}

</mosaic_0001>

<llo_original>
// kernel: tpu_custom_call.1
$region0: #{tpu_custom_call.1}
  #allocation0 [shape = 'u32[]', space=smem, size = 0x4, offset = 0x4, fixed_abs, tag = 'smem constant byte address 0x4 - core index']
  #allocation1 [shape = 'u32[144,128]{1,0:T(1,128)}', space=vmem, size = 0x12000, scoped, tag = 'internal scratch']
  %s0 = inlined_call_operand.vmem [shape: s32[2,8,1], index: 0, kind: input, shape index: {}]
  %s1 = inlined_call_operand.vmem [shape: f32[2,4,8], index: 1, kind: input, shape index: {}]
  %s2 = inlined_call_operand.hbm [shape: f32[2,4,256], index: 2, kind: output, shape index: {}]
  %s3 = sld [smem:[#allocation0]]
  $region18: #{tpu_custom_call.1} parent=0
    _
  %s5 = ssub.s32 1, %s3
  %s6 = scalar_select 0, %s5, %s3
  $region1: #{tpu_custom_call.1} parent=0
    #allocation2 [shape = 'u8[8192]{0}', space=vmem, size = 0x2000, scoped, tag = 'output window, operand 0, single buffered']
    #allocation3 [shape = 's32[1]{0}', space=sflag, size = 0x4, scoped, tag = 'scoped memory for tpu_custom_call.1']
    %7 = vsyncpa [#allocation3], 0
    // Predicated region
    $region2: #{tpu_custom_call.1} parent=1 // pred_check
      _
    $region3: #{tpu_custom_call.1} parent=1 // pred_check_branch
      %9 = sbr.rel (0) target = $region5
    $region4: #{tpu_custom_call.1} parent=1 // pred_region
      _
    $region5: #{tpu_custom_call.1} parent=1 // pred_fallthru
      _
    // Predicated region
    $region6: #{tpu_custom_call.1} parent=1 // pred_check
      _
    $region7: #{tpu_custom_call.1} parent=1 // pred_check_branch
      %11 = sbr.rel (0) target = $region9
    $region8: #{tpu_custom_call.1} parent=1 // pred_region
      _
    $region9: #{tpu_custom_call.1} parent=1 // pred_fallthru
      _
    %s12 = smul.u32 0, 256
    %v13 = vld [vmem:[%s0] sm:$0xff]
    %v14 = vlaneseq
    %v15 = vand.u32 %v14, 127
    %v16 = vadd.s32 %v15, 128
    %v17 = vstv %s12
    %v18 = vadd.s32 %v15, %v17
    %v19 = vadd.s32 %v16, %v17
    %20 = vset.pattern.permute.xlu0 0
    %21 = vperm.xlu0 %20, %v13
    %v22 = vpop.permute.xlu0 %21
    %vm23 = vcmp.eq.s32.totalorder %v18, %v22
    %vm24 = vcmp.eq.s32.totalorder %v19, %v22
    %v25 = vsel %vm23, 1, 0
    %v26 = vsel %vm24, 1, 0
    %v27 = vcvt.s32.f32 %v25
    %v28 = vcvt.s32.f32 %v26
    %v29 = vld [vmem:[%s1] sm:$0xf]
    %vm30 = vcmask 64512
    %v32 = vsel %vm30, %v29, 0
    %34 = vmatprep.subr.mxu0 %v28
    %35 = vmatpush1.msra.mxu0 %v27
    %36 = vmatprep.subr.mxu0 0.0
    %37 = vmatpush1.msra.mxu0 0.0
    %38 = vmatprep.subr.mxu0 0.0
    %39 = vmatpush1.msra.mxu0 0.0
    %40 = vmatprep.subr.mxu0 0.0
    %41 = vmatpush1.msra.mxu0 0.0
    %42 = vmatprep.subr.mxu0 0.0
    %43 = vmatpush1.msra.mxu0 0.0
    %44 = vmatprep.subr.mxu0 0.0
    %45 = vmatpush1.msra.mxu0 0.0
    %46 = vmatprep.subr.mxu0 0.0
    %47 = vmatpush1.msra.mxu0 0.0
    %48 = vmatprep.subr.mxu0 0.0
    %49 = vmatpush1.msra.mxu0 0.0
    %50 = vmatprep.subr.mxu0 0.0
    %51 = vmatpush1.msra.mxu0 0.0
    %52 = vmatprep.subr.mxu0 0.0
    %53 = vmatpush1.msra.mxu0 0.0
    %54 = vmatprep.subr.mxu0 0.0
    %55 = vmatpush1.msra.mxu0 0.0
    %56 = vmatprep.subr.mxu0 0.0
    %57 = vmatpush1.msra.mxu0 0.0
    %58 = vmatprep.subr.mxu0 0.0
    %59 = vmatpush1.msra.mxu0 0.0
    %60 = vmatprep.subr.mxu0 0.0
    %61 = vmatpush1.msra.mxu0 0.0
    %62 = vmatprep.subr.mxu0 0.0
    %63 = vmatpush1.msra.mxu0 0.0
    %64 = vmatprep.subr.mxu0 0.0
    %65 = vmatpush1.msra.mxu0 0.0
    %66 = vmatprep.subr.mxu0 0.0
    %67 = vmatpush1.msra.mxu0 0.0
    %68 = vmatprep.subr.mxu0 0.0
    %69 = vmatpush1.msra.mxu0 0.0
    %70 = vmatprep.subr.mxu0 0.0
    %71 = vmatpush1.msra.mxu0 0.0
    %72 = vmatprep.subr.mxu0 0.0
    %73 = vmatpush1.msra.mxu0 0.0
    %74 = vmatprep.subr.mxu0 0.0
    %75 = vmatpush1.msra.mxu0 0.0
    %76 = vmatprep.subr.mxu0 0.0
    %77 = vmatpush1.msra.mxu0 0.0
    %78 = vmatprep.subr.mxu0 0.0
    %79 = vmatpush1.msra.mxu0 0.0
    %80 = vmatprep.subr.mxu0 0.0
    %81 = vmatpush1.msra.mxu0 0.0
    %82 = vmatprep.subr.mxu0 0.0
    %83 = vmatpush1.msra.mxu0 0.0
    %84 = vmatprep.subr.mxu0 0.0
    %85 = vmatpush1.msra.mxu0 0.0
    %86 = vmatprep.subr.mxu0 0.0
    %87 = vmatpush1.msra.mxu0 0.0
    %88 = vmatprep.subr.mxu0 0.0
    %89 = vmatpush1.msra.mxu0 0.0
    %90 = vmatprep.subr.mxu0 0.0
    %91 = vmatpush1.msra.mxu0 0.0
    %92 = vmatprep.subr.mxu0 0.0
    %93 = vmatpush1.msra.mxu0 0.0
    %94 = vmatprep.subr.mxu0 0.0
    %95 = vmatpush1.msra.mxu0 0.0
    %96 = vmatprep.subr.mxu0 0.0
    %97 = vmatpush1.msra.mxu0 0.0
    %98 = vmatprep.mubr.f32.mxu0 0.0
    %99 = vmatmul.mubr.f32.gmra.mrb[0].mxu0 %v32
    %v100 = vpop.f32.mrb[0].mxu0
    %v101 = vadd.f32 0.0, %v100
    %v102 = vpop.f32.mrb[0].mxu0
    %v103 = vadd.f32 0.0, %v102
    %104 = vdwg.mxu0
    %v107 = vcombine.low %v101, %v103
    %109 = vst [vmem:[#allocation2] sm:$0xff] %v107
    %s110 = scalar_lea.vmem %s0, 8
    %v111 = vld [vmem:[%s110] sm:$0xff]
    %112 = vset.pattern.permute.xlu0 0
    %113 = vperm.xlu0 %112, %v111
    %v114 = vpop.permute.xlu0 %113
    %vm115 = vcmp.eq.s32.totalorder %v18, %v114
    %vm116 = vcmp.eq.s32.totalorder %v19, %v114
    %v117 = vsel %vm115, 1, 0
    %v118 = vsel %vm116, 1, 0
    %v119 = vcvt.s32.f32 %v117
    %v120 = vcvt.s32.f32 %v118
    %s121 = scalar_lea.vmem %s1, 4
    %v122 = vld [vmem:[%s121] sm:$0xf]
    %v124 = vsel %vm30, %v122, 0
    %126 = vmatprep.subr.mxu0 %v120
    %127 = vmatpush1.msra.mxu0 %v119
    %128 = vmatprep.subr.mxu0 0.0
    %129 = vmatpush1.msra.mxu0 0.0
    %130 = vmatprep.subr.mxu0 0.0
    %131 = vmatpush1.msra.mxu0 0.0
    %132 = vmatprep.subr.mxu0 0.0
    %133 = vmatpush1.msra.mxu0 0.0
    %134 = vmatprep.subr.mxu0 0.0
    %135 = vmatpush1.msra.mxu0 0.0
    %136 = vmatprep.subr.mxu0 0.0
    %137 = vmatpush1.msra.mxu0 0.0
    %138 = vmatprep.subr.mxu0 0.0
    %139 = vmatpush1.msra.mxu0 0.0
    %140 = vmatprep.subr.mxu0 0.0
    %141 = vmatpush1.msra.mxu0 0.0
    %142 = vmatprep.subr.mxu0 0.0
    %143 = vmatpush1.msra.mxu0 0.0
    %144 = vmatprep.subr.mxu0 0.0
    %145 = vmatpush1.msra.mxu0 0.0
    %146 = vmatprep.subr.mxu0 0.0
    %147 = vmatpush1.msra.mxu0 0.0
    %148 = vmatprep.subr.mxu0 0.0
    %149 = vmatpush1.msra.mxu0 0.0
    %150 = vmatprep.subr.mxu0 0.0
    %151 = vmatpush1.msra.mxu0 0.0
    %152 = vmatprep.subr.mxu0 0.0
    %153 = vmatpush1.msra.mxu0 0.0
    %154 = vmatprep.subr.mxu0 0.0
    %155 = vmatpush1.msra.mxu0 0.0
    %156 = vmatprep.subr.mxu0 0.0
    %157 = vmatpush1.msra.mxu0 0.0
    %158 = vmatprep.subr.mxu0 0.0
    %159 = vmatpush1.msra.mxu0 0.0
    %160 = vmatprep.subr.mxu0 0.0
    %161 = vmatpush1.msra.mxu0 0.0
    %162 = vmatprep.subr.mxu0 0.0
    %163 = vmatpush1.msra.mxu0 0.0
    %164 = vmatprep.subr.mxu0 0.0
    %165 = vmatpush1.msra.mxu0 0.0
    %166 = vmatprep.subr.mxu0 0.0
    %167 = vmatpush1.msra.mxu0 0.0
    %168 = vmatprep.subr.mxu0 0.0
    %169 = vmatpush1.msra.mxu0 0.0
    %170 = vmatprep.subr.mxu0 0.0
    %171 = vmatpush1.msra.mxu0 0.0
    %172 = vmatprep.subr.mxu0 0.0
    %173 = vmatpush1.msra.mxu0 0.0
    %174 = vmatprep.subr.mxu0 0.0
    %175 = vmatpush1.msra.mxu0 0.0
    %176 = vmatprep.subr.mxu0 0.0
    %177 = vmatpush1.msra.mxu0 0.0
    %178 = vmatprep.subr.mxu0 0.0
    %179 = vmatpush1.msra.mxu0 0.0
    %180 = vmatprep.subr.mxu0 0.0
    %181 = vmatpush1.msra.mxu0 0.0
    %182 = vmatprep.subr.mxu0 0.0
    %183 = vmatpush1.msra.mxu0 0.0
    %184 = vmatprep.subr.mxu0 0.0
    %185 = vmatpush1.msra.mxu0 0.0
    %186 = vmatprep.subr.mxu0 0.0
    %187 = vmatpush1.msra.mxu0 0.0
    %188 = vmatprep.subr.mxu0 0.0
    %189 = vmatpush1.msra.mxu0 0.0
    %190 = vmatprep.mubr.f32.mxu0 0.0
    %191 = vmatmul.mubr.f32.gmra.mrb[0].mxu0 %v124
    %v192 = vpop.f32.mrb[0].mxu0
    %v193 = vadd.f32 0.0, %v192
    %v194 = vpop.f32.mrb[0].mxu0
    %v195 = vadd.f32 0.0, %v194
    %196 = vdwg.mxu0
    %v199 = vcombine.low %v193, %v195
    %s201 = scalar_lea.vmem [#allocation2], 8
    %202 = vst [vmem:[%s201] sm:$0xff] %v199
    // Predicated region
    $region10: #{tpu_custom_call.1} parent=1 // pred_check
      _
    $region11: #{tpu_custom_call.1} parent=1 // pred_check_branch
      %204 = sbr.rel (0) target = $region13
    $region12: #{tpu_custom_call.1} parent=1 // pred_region
      %s206 = ssub.s32 256, 256
      %207 = vsyncadd [#allocation3], %s206
      %s208 = sshll.u32 [#allocation2], 4
      %s209 = int_to_ptr.vmem [resolvable:$true] %s208
      %214 = dma.vmem_to_hbm [thread:$0]  %s209, 256, %s2, [#allocation3], 128, 128, 8
    $region13: #{tpu_custom_call.1} parent=1 // pred_fallthru
      _
    // Predicated region
    $region14: #{tpu_custom_call.1} parent=1 // pred_check
      _
    $region15: #{tpu_custom_call.1} parent=1 // pred_check_branch
      %216 = sbr.rel (0) target = $region17
    $region16: #{tpu_custom_call.1} parent=1 // pred_region
      %217 = dma.done [#allocation3], 256
    $region17: #{tpu_custom_call.1} parent=1 // pred_fallthru
      _
    %218 = vsyncpa [#allocation3], 1

</llo_original>
